<compile_context>
chip_gen: v5e
topology: v5e:2x2
jax: 0.10.0
libtpu: 0.0.40
codegen_flags: <defaults>
</compile_context>

<pallas_src>
import math
import numpy as np
import jax
import jax.numpy as jnp
from jax.experimental import pallas as pl
from jax.experimental.pallas import tpu as pltpu


def _round_up(x: int, m: int) -> int:
    return ((x + m - 1) // m) * m


def _fixed_sinusoid_table(c_in: int, d_model: int) -> np.ndarray:
    """Same construction as FixedEmbedding.__init__ (torch code), in numpy."""
    w = np.zeros((c_in, d_model), dtype=np.float64)
    position = np.arange(c_in, dtype=np.float64)[:, None]                 # (c_in, 1)
    div_term = np.exp(np.arange(0, d_model, 2, dtype=np.float64)
                      * -(math.log(10000.0) / d_model))                   # (ceil(d_model/2),)
    w[:, 0::2] = np.sin(position * div_term)
    w[:, 1::2] = np.cos(position * div_term)
    return w.astype(np.float32)                                           # (c_in, d_model)


def _vmem_capacity_bytes() -> int:
    """Per-TensorCore VMEM capacity; conservative fallback if query unavailable."""
    try:
        return int(pltpu.get_tpu_info().vmem_capacity_bytes)
    except Exception:
        return 64 * 1024 * 1024   # v7x per-TC VMEM (smallest across generations)


def _fixed_embedding_kernel(idx_ref, tab_ref, o_ref):
    # idx_ref: (TR, K) int32 -- column j already offset by j*c_in_p in the wrapper
    # tab_ref: (K*c_in_p, LANES) f32 block-diagonal table (grid-invariant)
    # o_ref:   (TR, LANES) out dtype
    idx = idx_ref[...]
    tr, k = idx.shape
    kcp = tab_ref.shape[0]
    lane = jax.lax.broadcasted_iota(jnp.int32, (tr, kcp), 1)
    # One-hot over the K*c_in_p contraction axis; each column j hits a disjoint lane group,
    # so a sum of K comparisons is an exact one-hot (K is small: <= 16).
    one_hot = (lane == idx[:, 0:1]).astype(jnp.float32)
    for j in range(1, k):
        one_hot = one_hot + (lane == idx[:, j:j + 1]).astype(jnp.float32)
    # Embedding lookup as one MXU matmul; HIGHEST keeps the f32 table exact.
    o_ref[...] = jnp.dot(one_hot, tab_ref[...],
                         preferred_element_type=jnp.float32,
                         precision=jax.lax.Precision.HIGHEST).astype(o_ref.dtype)


def fixed_embedding(x, table, *, out_dtype=None, max_tile_rows: int = 4096):
    """x: integer indices (any shape), values in [0, c_in); table: (c_in, d_model).
    Returns table[x] with shape x.shape + (d_model,)."""
    orig_shape = x.shape
    c_in, d_model = table.shape
    out_dtype = jnp.dtype(out_dtype) if out_dtype is not None else jnp.dtype(table.dtype)
    out_itemsize = out_dtype.itemsize

    idx = jnp.asarray(x, dtype=jnp.int32).reshape(-1)
    n = int(idx.shape[0])

    # Sublane-align the MXU contraction (K) dim.
    c_in_p = _round_up(c_in, 8)
    tab = jnp.asarray(table, jnp.float32)
    if c_in_p != c_in:
        tab = jnp.pad(tab, ((0, c_in_p - c_in), (0, 0)))

    # Lane packing factor: fold k index rows per 128-lane output row (zero wasted bytes).
    k = 1
    if d_model < 128 and 128 % d_model == 0:
        k_cand = 128 // d_model
        if k_cand <= 16 and n % k_cand == 0:
            k = k_cand

    if k > 1:
        # Block-diagonal table: row j*c_in_p + v has table[v] in lanes [j*d_model,(j+1)*d_model).
        tab = jnp.kron(jnp.eye(k, dtype=jnp.float32), tab)        # (k*c_in_p, k*d_model)
        idx2 = (idx.reshape(n // k, k)
                + (jnp.arange(k, dtype=jnp.int32) * c_in_p)[None, :])
    else:
        idx2 = idx.reshape(n, 1)

    rows, kk = int(idx2.shape[0]), int(idx2.shape[1])
    tab_rows, lanes = int(tab.shape[0]), int(tab.shape[1])
    tab_bytes = tab_rows * lanes * 4

    # --- tile sizing: VMEM-budget and generation aware ---
    capacity = _vmem_capacity_bytes()
    budget = min(capacity // 4, 24 * 1024 * 1024)                 # for double-buffered tiles
    budget_rows = max(budget - 2 * tab_bytes, 1 << 20)
    per_row_db = 2 * (lanes * out_itemsize + kk * 4)              # double-buffered out + idx
    tr = budget_rows // max(per_row_db, 1)
    tr = max(8, min(tr, max_tile_rows))
    tr = (tr // 8) * 8
    rows8 = _round_up(rows, 8)
    tr = min(tr, rows8)
    if rows8 >= 16:
        # Guarantee >=2 grid steps so the "parallel" axis can shard across v7x's 2 TCs.
        tr = min(tr, max(8, _round_up(rows8 // 2, 8)))
    if rows < 8:
        tr = rows                                                  # full-dim block for tiny inputs
    tr = max(tr, 1)

    grid = (pl.cdiv(rows, tr),)

    used_vmem = 2 * (tr * lanes * out_itemsize + tr * kk * 4 + tab_bytes)
    vmem_limit = int(min(max(used_vmem + (4 << 20), 16 << 20), (capacity * 3) // 4))

    out = pl.pallas_call(
        _fixed_embedding_kernel,
        out_shape=jax.ShapeDtypeStruct((rows, lanes), out_dtype),
        grid_spec=pltpu.PrefetchScalarGridSpec(
            num_scalar_prefetch=0,
            grid=grid,
            in_specs=[
                pl.BlockSpec((tr, kk), lambda i: (i, 0)),           # pre-offset index tile
                # Grid-invariant table (kept simple; pl.Buffered(1) skipped — table is tiny).
                pl.BlockSpec((tab_rows, lanes), lambda i: (0, 0)),
            ],
            out_specs=pl.BlockSpec((tr, lanes), lambda i: (i, 0)),
        ),
        compiler_params=pltpu.CompilerParams(
            dimension_semantics=("parallel",),                      # megacore / 2-TC split
            vmem_limit_bytes=vmem_limit,
        ),
        cost_estimate=pl.CostEstimate(
            flops=6 * 2 * rows * tab_rows * lanes,                  # ~6 MXU passes for f32 HIGHEST
            transcendentals=0,
            bytes_accessed=rows * kk * 4 + tab_bytes + rows * lanes * out_itemsize,
        ),
    )(idx2, tab)

    # Contiguous row-major reinterpretation — no extra HBM copy.
    return out.reshape(*orig_shape, d_model)


if __name__ == "__main__":
    key = jax.random.PRNGKey(0)

    # Typical FixedEmbedding usage inside TemporalEmbedding: small integer vocab
    # (e.g. hour-of-day = 24) indexed by a (batch, seq_len) tensor. d_model=32 exercises
    # the packed lane-dense path (k = 4 rows per 128-lane store).
    B, L = 2, 8
    C_IN, D_MODEL = 24, 32
    x = jax.random.randint(key, (B, L), 0, C_IN, dtype=jnp.int32)
    table = jnp.asarray(_fixed_sinusoid_table(C_IN, D_MODEL))       # (c_in, d_model)

    out = jax.block_until_ready(fixed_embedding(x, table))
    ref = jnp.take(table, x, axis=0)                                # nn.Embedding forward
    assert out.shape == (B, L, D_MODEL)
    np.testing.assert_allclose(np.asarray(out), np.asarray(ref), rtol=1e-5, atol=1e-6)

    # Secondary check: d_model that does not divide 128 -> unpacked path (masked edge stores).
    C2, D2 = 24, 96
    x2 = jax.random.randint(jax.random.PRNGKey(1), (B, L), 0, C2, dtype=jnp.int32)
    table2 = jnp.asarray(_fixed_sinusoid_table(C2, D2))
    out2 = jax.block_until_ready(fixed_embedding(x2, table2))
    ref2 = jnp.take(table2, x2, axis=0)
    assert out2.shape == (B, L, D2)
    np.testing.assert_allclose(np.asarray(out2), np.asarray(ref2), rtol=1e-5, atol=1e-6)

    print("KERNEL_OK")
</pallas_src>

<mosaic_0001>
module attributes {stable_mosaic.version = 11 : i64} {
  func.func @_fixed_embedding_kernel(%arg0: i32, %arg1: memref<4x4xi32, #tpu.memory_space<vmem>>, %arg2: memref<96x128xf32, #tpu.memory_space<vmem>>, %arg3: memref<4x128xf32, #tpu.memory_space<vmem>>) attributes {dimension_semantics = [#tpu.dimension_semantics<parallel>], iteration_bounds = array<i64: 1>, scalar_prefetch = 0 : i64, scratch_operands = 0 : i64, tpu.core_type = #tpu.core_type<tc>, window_params = [{transform_indices = @transform_0, window_bounds = array<i64: 4, 4>}, {pipeline_mode = #tpu.pipeline_mode<synchronous>, transform_indices = @transform_1, window_bounds = array<i64: 96, 128>}, {transform_indices = @transform_2, window_bounds = array<i64: 4, 128>}]} {
    %c0 = arith.constant 0 : index
    %c0_0 = arith.constant 0 : index
    %0 = vector.load %arg1[%c0, %c0_0] : memref<4x4xi32, #tpu.memory_space<vmem>>, vector<4x4xi32>
    %1 = tpu.iota {dimensions = array<i32: 1>} : vector<4x96xi32>
    %2 = vector.extract_strided_slice %0 {offsets = [0, 0], sizes = [4, 1], strides = [1, 1]} : vector<4x4xi32> to vector<4x1xi32>
    %3 = vector.broadcast %2 : vector<4x1xi32> to vector<4x96xi32>
    %4 = arith.cmpi eq, %1, %3 : vector<4x96xi32>
    %5 = arith.extui %4 : vector<4x96xi1> to vector<4x96xi32>
    %6 = arith.sitofp %5 : vector<4x96xi32> to vector<4x96xf32>
    %7 = vector.extract_strided_slice %0 {offsets = [0, 1], sizes = [4, 1], strides = [1, 1]} : vector<4x4xi32> to vector<4x1xi32>
    %8 = vector.broadcast %7 : vector<4x1xi32> to vector<4x96xi32>
    %9 = arith.cmpi eq, %1, %8 : vector<4x96xi32>
    %10 = arith.extui %9 : vector<4x96xi1> to vector<4x96xi32>
    %11 = arith.sitofp %10 : vector<4x96xi32> to vector<4x96xf32>
    %12 = arith.addf %6, %11 : vector<4x96xf32>
    %13 = vector.extract_strided_slice %0 {offsets = [0, 2], sizes = [4, 1], strides = [1, 1]} : vector<4x4xi32> to vector<4x1xi32>
    %14 = vector.broadcast %13 : vector<4x1xi32> to vector<4x96xi32>
    %15 = arith.cmpi eq, %1, %14 : vector<4x96xi32>
    %16 = arith.extui %15 : vector<4x96xi1> to vector<4x96xi32>
    %17 = arith.sitofp %16 : vector<4x96xi32> to vector<4x96xf32>
    %18 = arith.addf %12, %17 : vector<4x96xf32>
    %19 = vector.extract_strided_slice %0 {offsets = [0, 3], sizes = [4, 1], strides = [1, 1]} : vector<4x4xi32> to vector<4x1xi32>
    %20 = vector.broadcast %19 : vector<4x1xi32> to vector<4x96xi32>
    %21 = arith.cmpi eq, %1, %20 : vector<4x96xi32>
    %22 = arith.extui %21 : vector<4x96xi1> to vector<4x96xi32>
    %23 = arith.sitofp %22 : vector<4x96xi32> to vector<4x96xf32>
    %24 = arith.addf %18, %23 : vector<4x96xf32>
    %c0_1 = arith.constant 0 : index
    %c0_2 = arith.constant 0 : index
    %25 = vector.load %arg2[%c0_1, %c0_2] : memref<96x128xf32, #tpu.memory_space<vmem>>, vector<96x128xf32>
    %cst = arith.constant dense<0.000000e+00> : vector<4x128xf32>
    %26 = tpu.matmul %24, %25, %cst {dimension_numbers = #tpu.dot_dimension_numbers<[1], [0], [0], [1], [0, 0, 1, 1], [], []>, precision = #tpu.contract_precision<fp32>} : vector<4x96xf32>, vector<96x128xf32>, vector<4x128xf32> -> vector<4x128xf32>
    %c0_3 = arith.constant 0 : index
    %c0_4 = arith.constant 0 : index
    %27 = vector.load %arg3[%c0_3, %c0_4] : memref<4x128xf32, #tpu.memory_space<vmem>>, vector<4x128xf32>
    tpu.vector_store %arg3[%c0_3, %c0_4], %26 {strides = array<i32>} : memref<4x128xf32, #tpu.memory_space<vmem>>, vector<4x128xf32>,
    return
  }
  func.func @transform_0(%arg0: i32) -> (i32, i32) {
    %c0_i32 = arith.constant 0 : i32
    %c0_i32_0 = arith.constant 0 : i32
    return %arg0, %c0_i32 : i32, i32
  }
  func.func @transform_1(%arg0: i32) -> (i32, i32) {
    %c0_i32 = arith.constant 0 : i32
    %c0_i32_0 = arith.constant 0 : i32
    %c0_i32_1 = arith.constant 0 : i32
    return %c0_i32, %c0_i32_0 : i32, i32
  }
  func.func @transform_2(%arg0: i32) -> (i32, i32) {
    %c0_i32 = arith.constant 0 : i32
    %c0_i32_0 = arith.constant 0 : i32
    return %arg0, %c0_i32 : i32, i32
  }
}

</mosaic_0001>

<llo_original>
// kernel: tpu_custom_call.1
$region0: #{tpu_custom_call.1}
  #allocation0 [shape = 'u32[]', space=smem, size = 0x4, offset = 0x4, fixed_abs, tag = 'smem constant byte address 0x4 - core index']
  #allocation1 [shape = 'u32[72,128]{1,0:T(1,128)}', space=vmem, size = 0x9000, scoped, tag = 'internal scratch']
  %s0 = inlined_call_operand.hbm [shape: s32[4,4], index: 0, kind: input, shape index: {}]
  %s1 = inlined_call_operand.hbm [shape: f32[96,128], index: 1, kind: input, shape index: {}]
  %s2 = inlined_call_operand.hbm [shape: f32[4,128], index: 2, kind: output, shape index: {}]
  %s3 = sld [smem:[#allocation0]]
  $region26: #{tpu_custom_call.1} parent=0
    _
  %s5 = ssub.s32 1, %s3
  %s6 = scalar_select 0, %s5, %s3
  $region1: #{tpu_custom_call.1} parent=0
    #allocation2 [shape = 'u8[2048]{0}', space=vmem, size = 0x800, scoped, tag = 'input window, operand 0, single buffered']
    #allocation3 [shape = 's32[1]{0}', space=sflag, size = 0x4, scoped, tag = 'scoped memory for tpu_custom_call.1']
    #allocation4 [shape = 's32[1]{0}', space=sflag, size = 0x4, scoped, tag = 'scoped memory for tpu_custom_call.1']
    #allocation5 [shape = 'u8[49152]{0}', space=vmem, size = 0xc000, scoped, tag = 'input window, operand 1, single buffered']
    #allocation6 [shape = 's32[1]{0}', space=sflag, size = 0x4, scoped, tag = 'scoped memory for tpu_custom_call.1']
    #allocation7 [shape = 'u8[2048]{0}', space=vmem, size = 0x800, scoped, tag = 'output window, operand 0, single buffered']
    %7 = vsyncpa [#allocation3], 0
    %8 = vsyncpa [#allocation6], 0
    %9 = vsyncpa [#allocation4], 0
    // Predicated region
    $region2: #{tpu_custom_call.1} parent=1 // pred_check
      _
    $region3: #{tpu_custom_call.1} parent=1 // pred_check_branch
      %11 = sbr.rel (0) target = $region5
    $region4: #{tpu_custom_call.1} parent=1 // pred_region
      %13 = vsyncadd [#allocation3], 0
      %s15 = sshll.u32 %s0, 4
      %s16 = int_to_ptr.hbm [resolvable:$true] %s15
      %s17 = sshll.u32 [#allocation2], 4
      %s18 = int_to_ptr.vmem [resolvable:$true] %s17
      %20 = dma.hbm_to_vmem [thread:$0]  %s16, 64, %s18, [#allocation3]
    $region5: #{tpu_custom_call.1} parent=1 // pred_fallthru
      _
    // Predicated region
    $region6: #{tpu_custom_call.1} parent=1 // pred_check
      _
    $region7: #{tpu_custom_call.1} parent=1 // pred_check_branch
      %22 = sbr.rel (0) target = $region9
    $region8: #{tpu_custom_call.1} parent=1 // pred_region
      %24 = vsyncadd [#allocation6], 0
      %s25 = sshll.u32 %s1, 4
      %s26 = int_to_ptr.hbm [resolvable:$true] %s25
      %s27 = sshll.u32 [#allocation5], 4
      %s28 = int_to_ptr.vmem [resolvable:$true] %s27
      %33 = dma.hbm_to_vmem [thread:$0]  %s26, 1536, %s28, [#allocation6], 128, 128, 8
    $region9: #{tpu_custom_call.1} parent=1 // pred_fallthru
      _
    // Predicated region
    $region10: #{tpu_custom_call.1} parent=1 // pred_check
      _
    $region11: #{tpu_custom_call.1} parent=1 // pred_check_branch
      %35 = sbr.rel (0) target = $region13
    $region12: #{tpu_custom_call.1} parent=1 // pred_region
      %37 = dma.done [#allocation3], 64
    $region13: #{tpu_custom_call.1} parent=1 // pred_fallthru
      _
    // Predicated region
    $region14: #{tpu_custom_call.1} parent=1 // pred_check
      _
    $region15: #{tpu_custom_call.1} parent=1 // pred_check_branch
      %39 = sbr.rel (0) target = $region17
    $region16: #{tpu_custom_call.1} parent=1 // pred_region
      %41 = dma.done [#allocation6], 1536
    $region17: #{tpu_custom_call.1} parent=1 // pred_fallthru
      _
    %v42 = vld [vmem:[#allocation2] sm:$0xf]
    %v43 = vlaneseq
    %v44 = vand.u32 %v43, 127
    %45 = vset.pattern.permute.xlu0 0
    %46 = vperm.xlu0 %45, %v42
    %v47 = vpop.permute.xlu0 %46
    %vm48 = vcmp.eq.s32.totalorder %v44, %v47
    %v49 = vsel %vm48, 1, 0
    %v50 = vcvt.s32.f32 %v49
    %51 = vset.pattern.permute.xlu0 1
    %52 = vperm.xlu0 %51, %v42
    %v53 = vpop.permute.xlu0 %52
    %vm54 = vcmp.eq.s32.totalorder %v44, %v53
    %v55 = vsel %vm54, 1, 0
    %v56 = vcvt.s32.f32 %v55
    %v57 = vadd.f32 %v50, %v56
    %58 = vset.pattern.permute.xlu0 2
    %59 = vperm.xlu0 %58, %v42
    %v60 = vpop.permute.xlu0 %59
    %vm61 = vcmp.eq.s32.totalorder %v44, %v60
    %v62 = vsel %vm61, 1, 0
    %v63 = vcvt.s32.f32 %v62
    %v64 = vadd.f32 %v57, %v63
    %65 = vset.pattern.permute.xlu0 3
    %66 = vperm.xlu0 %65, %v42
    %v67 = vpop.permute.xlu0 %66
    %vm68 = vcmp.eq.s32.totalorder %v44, %v67
    %v69 = vsel %vm68, 1, 0
    %v70 = vcvt.s32.f32 %v69
    %v71 = vadd.f32 %v64, %v70
    %v72 = vld [vmem:[#allocation5] sm:$0xff]
    %v73 = vld [vmem:[#allocation5 + $0x8] sm:$0xff]
    %v74 = vld [vmem:[#allocation5 + $0x10] sm:$0xff]
    %v75 = vld [vmem:[#allocation5 + $0x18] sm:$0xff]
    %v76 = vld [vmem:[#allocation5 + $0x20] sm:$0xff]
    %v77 = vld [vmem:[#allocation5 + $0x28] sm:$0xff]
    %v78 = vld [vmem:[#allocation5 + $0x30] sm:$0xff]
    %v79 = vld [vmem:[#allocation5 + $0x38] sm:$0xff]
    %v80 = vld [vmem:[#allocation5 + $0x40] sm:$0xff]
    %v81 = vld [vmem:[#allocation5 + $0x48] sm:$0xff]
    %v82 = vld [vmem:[#allocation5 + $0x50] sm:$0xff]
    %v83 = vld [vmem:[#allocation5 + $0x58] sm:$0xff]
    %vm84 = vcmask 785408
    %v86 = vsel %vm84, %v71, 0
    %88 = vmatpush.msra.mxu0 0.0
    %89 = vmatpush.msra.mxu0 0.0
    %90 = vmatpush.msra.mxu0 0.0
    %91 = vmatpush.msra.mxu0 0.0
    %v92 = vand.u32 %v83, 4294901760
    %93 = vmatpush.msra.mxu0 %v92
    %v94 = vand.u32 %v82, 4294901760
    %95 = vmatpush.msra.mxu0 %v94
    %v96 = vand.u32 %v81, 4294901760
    %97 = vmatpush.msra.mxu0 %v96
    %v98 = vand.u32 %v80, 4294901760
    %99 = vmatpush.msra.mxu0 %v98
    %v100 = vand.u32 %v79, 4294901760
    %101 = vmatpush.msra.mxu0 %v100
    %v102 = vand.u32 %v78, 4294901760
    %103 = vmatpush.msra.mxu0 %v102
    %v104 = vand.u32 %v77, 4294901760
    %105 = vmatpush.msra.mxu0 %v104
    %v106 = vand.u32 %v76, 4294901760
    %107 = vmatpush.msra.mxu0 %v106
    %v108 = vand.u32 %v75, 4294901760
    %109 = vmatpush.msra.mxu0 %v108
    %v110 = vand.u32 %v74, 4294901760
    %111 = vmatpush.msra.mxu0 %v110
    %v112 = vand.u32 %v73, 4294901760
    %113 = vmatpush.msra.mxu0 %v112
    %v114 = vand.u32 %v72, 4294901760
    %115 = vmatpush.msra.mxu0 %v114
    %v116 = vand.u32 %v86, 4294901760
    %v117 = vsub.f32 %v86, %v116
    %v118 = vand.u32 %v117, 4294901760
    %v119 = vsub.f32 %v117, %v118
    %v120 = vand.u32 %v119, 4294901760
    %121 = vmatmul.f32.gmra.mxu0 %v120
    %v122 = vpop.f32.mrf.mxu0
    %v123 = vadd.f32 0.0, %v122
    %124 = vdwg.mxu0
    %125 = vmatpush.msra.mxu0 0.0
    %126 = vmatpush.msra.mxu0 0.0
    %127 = vmatpush.msra.mxu0 0.0
    %128 = vmatpush.msra.mxu0 0.0
    %v129 = vand.u32 %v83, 4294901760
    %v130 = vsub.f32 %v83, %v129
    %v131 = vand.u32 %v130, 4294901760
    %v132 = vsub.f32 %v130, %v131
    %v133 = vand.u32 %v132, 4294901760
    %134 = vmatpush.msra.mxu0 %v133
    %v135 = vand.u32 %v82, 4294901760
    %v136 = vsub.f32 %v82, %v135
    %v137 = vand.u32 %v136, 4294901760
    %v138 = vsub.f32 %v136, %v137
    %v139 = vand.u32 %v138, 4294901760
    %140 = vmatpush.msra.mxu0 %v139
    %v141 = vand.u32 %v81, 4294901760
    %v142 = vsub.f32 %v81, %v141
    %v143 = vand.u32 %v142, 4294901760
    %v144 = vsub.f32 %v142, %v143
    %v145 = vand.u32 %v144, 4294901760
    %146 = vmatpush.msra.mxu0 %v145
    %v147 = vand.u32 %v80, 4294901760
    %v148 = vsub.f32 %v80, %v147
    %v149 = vand.u32 %v148, 4294901760
    %v150 = vsub.f32 %v148, %v149
    %v151 = vand.u32 %v150, 4294901760
    %152 = vmatpush.msra.mxu0 %v151
    %v153 = vand.u32 %v79, 4294901760
    %v154 = vsub.f32 %v79, %v153
    %v155 = vand.u32 %v154, 4294901760
    %v156 = vsub.f32 %v154, %v155
    %v157 = vand.u32 %v156, 4294901760
    %158 = vmatpush.msra.mxu0 %v157
    %v159 = vand.u32 %v78, 4294901760
    %v160 = vsub.f32 %v78, %v159
    %v161 = vand.u32 %v160, 4294901760
    %v162 = vsub.f32 %v160, %v161
    %v163 = vand.u32 %v162, 4294901760
    %164 = vmatpush.msra.mxu0 %v163
    %v165 = vand.u32 %v77, 4294901760
    %v166 = vsub.f32 %v77, %v165
    %v167 = vand.u32 %v166, 4294901760
    %v168 = vsub.f32 %v166, %v167
    %v169 = vand.u32 %v168, 4294901760
    %170 = vmatpush.msra.mxu0 %v169
    %v171 = vand.u32 %v76, 4294901760
    %v172 = vsub.f32 %v76, %v171
    %v173 = vand.u32 %v172, 4294901760
    %v174 = vsub.f32 %v172, %v173
    %v175 = vand.u32 %v174, 4294901760
    %176 = vmatpush.msra.mxu0 %v175
    %v177 = vand.u32 %v75, 4294901760
    %v178 = vsub.f32 %v75, %v177
    %v179 = vand.u32 %v178, 4294901760
    %v180 = vsub.f32 %v178, %v179
    %v181 = vand.u32 %v180, 4294901760
    %182 = vmatpush.msra.mxu0 %v181
    %v183 = vand.u32 %v74, 4294901760
    %v184 = vsub.f32 %v74, %v183
    %v185 = vand.u32 %v184, 4294901760
    %v186 = vsub.f32 %v184, %v185
    %v187 = vand.u32 %v186, 4294901760
    %188 = vmatpush.msra.mxu0 %v187
    %v189 = vand.u32 %v73, 4294901760
    %v190 = vsub.f32 %v73, %v189
    %v191 = vand.u32 %v190, 4294901760
    %v192 = vsub.f32 %v190, %v191
    %v193 = vand.u32 %v192, 4294901760
    %194 = vmatpush.msra.mxu0 %v193
    %v195 = vand.u32 %v72, 4294901760
    %v196 = vsub.f32 %v72, %v195
    %v197 = vand.u32 %v196, 4294901760
    %v198 = vsub.f32 %v196, %v197
    %v199 = vand.u32 %v198, 4294901760
    %200 = vmatpush.msra.mxu0 %v199
    %v201 = vand.u32 %v86, 4294901760
    %202 = vmatmul.f32.gmra.mxu0 %v201
    %v203 = vpop.f32.mrf.mxu0
    %v204 = vadd.f32 %v123, %v203
    %205 = vdwg.mxu0
    %206 = vmatpush.msra.mxu0 0.0
    %207 = vmatpush.msra.mxu0 0.0
    %208 = vmatpush.msra.mxu0 0.0
    %209 = vmatpush.msra.mxu0 0.0
    %v210 = vand.u32 %v83, 4294901760
    %v211 = vsub.f32 %v83, %v210
    %212 = vmatpush.msra.mxu0 %v211
    %v213 = vand.u32 %v82, 4294901760
    %v214 = vsub.f32 %v82, %v213
    %215 = vmatpush.msra.mxu0 %v214
    %v216 = vand.u32 %v81, 4294901760
    %v217 = vsub.f32 %v81, %v216
    %218 = vmatpush.msra.mxu0 %v217
    %v219 = vand.u32 %v80, 4294901760
    %v220 = vsub.f32 %v80, %v219
    %221 = vmatpush.msra.mxu0 %v220
    %v222 = vand.u32 %v79, 4294901760
    %v223 = vsub.f32 %v79, %v222
    %224 = vmatpush.msra.mxu0 %v223
    %v225 = vand.u32 %v78, 4294901760
    %v226 = vsub.f32 %v78, %v225
    %227 = vmatpush.msra.mxu0 %v226
    %v228 = vand.u32 %v77, 4294901760
    %v229 = vsub.f32 %v77, %v228
    %230 = vmatpush.msra.mxu0 %v229
    %v231 = vand.u32 %v76, 4294901760
    %v232 = vsub.f32 %v76, %v231
    %233 = vmatpush.msra.mxu0 %v232
    %v234 = vand.u32 %v75, 4294901760
    %v235 = vsub.f32 %v75, %v234
    %236 = vmatpush.msra.mxu0 %v235
    %v237 = vand.u32 %v74, 4294901760
    %v238 = vsub.f32 %v74, %v237
    %239 = vmatpush.msra.mxu0 %v238
    %v240 = vand.u32 %v73, 4294901760
    %v241 = vsub.f32 %v73, %v240
    %242 = vmatpush.msra.mxu0 %v241
    %v243 = vand.u32 %v72, 4294901760
    %v244 = vsub.f32 %v72, %v243
    %245 = vmatpush.msra.mxu0 %v244
    %v246 = vand.u32 %v86, 4294901760
    %v247 = vsub.f32 %v86, %v246
    %248 = vmatmul.f32.gmra.mxu0 %v247
    %v249 = vpop.f32.mrf.mxu0
    %v250 = vadd.f32 %v204, %v249
    %251 = vdwg.mxu0
    %252 = vmatpush.msra.mxu0 0.0
    %253 = vmatpush.msra.mxu0 0.0
    %254 = vmatpush.msra.mxu0 0.0
    %255 = vmatpush.msra.mxu0 0.0
    %v256 = vand.u32 %v83, 4294901760
    %257 = vmatpush.msra.mxu0 %v256
    %v258 = vand.u32 %v82, 4294901760
    %259 = vmatpush.msra.mxu0 %v258
    %v260 = vand.u32 %v81, 4294901760
    %261 = vmatpush.msra.mxu0 %v260
    %v262 = vand.u32 %v80, 4294901760
    %263 = vmatpush.msra.mxu0 %v262
    %v264 = vand.u32 %v79, 4294901760
    %265 = vmatpush.msra.mxu0 %v264
    %v266 = vand.u32 %v78, 4294901760
    %267 = vmatpush.msra.mxu0 %v266
    %v268 = vand.u32 %v77, 4294901760
    %269 = vmatpush.msra.mxu0 %v268
    %v270 = vand.u32 %v76, 4294901760
    %271 = vmatpush.msra.mxu0 %v270
    %v272 = vand.u32 %v75, 4294901760
    %273 = vmatpush.msra.mxu0 %v272
    %v274 = vand.u32 %v74, 4294901760
    %275 = vmatpush.msra.mxu0 %v274
    %v276 = vand.u32 %v73, 4294901760
    %277 = vmatpush.msra.mxu0 %v276
    %v278 = vand.u32 %v72, 4294901760
    %279 = vmatpush.msra.mxu0 %v278
    %v280 = vand.u32 %v86, 4294901760
    %v281 = vsub.f32 %v86, %v280
    %v282 = vand.u32 %v281, 4294901760
    %283 = vmatmul.f32.gmra.mxu0 %v282
    %v284 = vpop.f32.mrf.mxu0
    %v285 = vadd.f32 %v250, %v284
    %286 = vdwg.mxu0
    %287 = vmatpush.msra.mxu0 0.0
    %288 = vmatpush.msra.mxu0 0.0
    %289 = vmatpush.msra.mxu0 0.0
    %290 = vmatpush.msra.mxu0 0.0
    %v291 = vand.u32 %v83, 4294901760
    %v292 = vsub.f32 %v83, %v291
    %v293 = vand.u32 %v292, 4294901760
    %294 = vmatpush.msra.mxu0 %v293
    %v295 = vand.u32 %v82, 4294901760
    %v296 = vsub.f32 %v82, %v295
    %v297 = vand.u32 %v296, 4294901760
    %298 = vmatpush.msra.mxu0 %v297
    %v299 = vand.u32 %v81, 4294901760
    %v300 = vsub.f32 %v81, %v299
    %v301 = vand.u32 %v300, 4294901760
    %302 = vmatpush.msra.mxu0 %v301
    %v303 = vand.u32 %v80, 4294901760
    %v304 = vsub.f32 %v80, %v303
    %v305 = vand.u32 %v304, 4294901760
    %306 = vmatpush.msra.mxu0 %v305
    %v307 = vand.u32 %v79, 4294901760
    %v308 = vsub.f32 %v79, %v307
    %v309 = vand.u32 %v308, 4294901760
    %310 = vmatpush.msra.mxu0 %v309
    %v311 = vand.u32 %v78, 4294901760
    %v312 = vsub.f32 %v78, %v311
    %v313 = vand.u32 %v312, 4294901760
    %314 = vmatpush.msra.mxu0 %v313
    %v315 = vand.u32 %v77, 4294901760
    %v316 = vsub.f32 %v77, %v315
    %v317 = vand.u32 %v316, 4294901760
    %318 = vmatpush.msra.mxu0 %v317
    %v319 = vand.u32 %v76, 4294901760
    %v320 = vsub.f32 %v76, %v319
    %v321 = vand.u32 %v320, 4294901760
    %322 = vmatpush.msra.mxu0 %v321
    %v323 = vand.u32 %v75, 4294901760
    %v324 = vsub.f32 %v75, %v323
    %v325 = vand.u32 %v324, 4294901760
    %326 = vmatpush.msra.mxu0 %v325
    %v327 = vand.u32 %v74, 4294901760
    %v328 = vsub.f32 %v74, %v327
    %v329 = vand.u32 %v328, 4294901760
    %330 = vmatpush.msra.mxu0 %v329
    %v331 = vand.u32 %v73, 4294901760
    %v332 = vsub.f32 %v73, %v331
    %v333 = vand.u32 %v332, 4294901760
    %334 = vmatpush.msra.mxu0 %v333
    %v335 = vand.u32 %v72, 4294901760
    %v336 = vsub.f32 %v72, %v335
    %v337 = vand.u32 %v336, 4294901760
    %338 = vmatpush.msra.mxu0 %v337
    %v339 = vand.u32 %v86, 4294901760
    %340 = vmatmul.f32.gmra.mxu0 %v339
    %v341 = vpop.f32.mrf.mxu0
    %v342 = vadd.f32 %v285, %v341
    %343 = vdwg.mxu0
    %344 = vmatpush.msra.mxu0 0.0
    %345 = vmatpush.msra.mxu0 0.0
    %346 = vmatpush.msra.mxu0 0.0
    %347 = vmatpush.msra.mxu0 0.0
    %v348 = vand.u32 %v83, 4294901760
    %349 = vmatpush.msra.mxu0 %v348
    %v350 = vand.u32 %v82, 4294901760
    %351 = vmatpush.msra.mxu0 %v350
    %v352 = vand.u32 %v81, 4294901760
    %353 = vmatpush.msra.mxu0 %v352
    %v354 = vand.u32 %v80, 4294901760
    %355 = vmatpush.msra.mxu0 %v354
    %v356 = vand.u32 %v79, 4294901760
    %357 = vmatpush.msra.mxu0 %v356
    %v358 = vand.u32 %v78, 4294901760
    %359 = vmatpush.msra.mxu0 %v358
    %v360 = vand.u32 %v77, 4294901760
    %361 = vmatpush.msra.mxu0 %v360
    %v362 = vand.u32 %v76, 4294901760
    %363 = vmatpush.msra.mxu0 %v362
    %v364 = vand.u32 %v75, 4294901760
    %365 = vmatpush.msra.mxu0 %v364
    %v366 = vand.u32 %v74, 4294901760
    %367 = vmatpush.msra.mxu0 %v366
    %v368 = vand.u32 %v73, 4294901760
    %369 = vmatpush.msra.mxu0 %v368
    %v370 = vand.u32 %v72, 4294901760
    %371 = vmatpush.msra.mxu0 %v370
    %v372 = vand.u32 %v86, 4294901760
    %373 = vmatmul.f32.gmra.mxu0 %v372
    %v374 = vpop.f32.mrf.mxu0
    %v375 = vadd.f32 %v342, %v374
    %376 = vdwg.mxu0
    %377 = vst [vmem:[#allocation7] sm:$0xf] %v375
    // Predicated region
    $region18: #{tpu_custom_call.1} parent=1 // pred_check
      _
    $region19: #{tpu_custom_call.1} parent=1 // pred_check_branch
      %379 = sbr.rel (0) target = $region21
    $region20: #{tpu_custom_call.1} parent=1 // pred_region
      %381 = vsyncadd [#allocation4], 0
      %s383 = sshll.u32 [#allocation7], 4
      %s384 = int_to_ptr.vmem [resolvable:$true] %s383
      %s385 = sshll.u32 %s2, 4
      %s386 = int_to_ptr.hbm [resolvable:$true] %s385
      %388 = dma.vmem_to_hbm [thread:$0]  %s384, 64, %s386, [#allocation4]
    $region21: #{tpu_custom_call.1} parent=1 // pred_fallthru
      _
    // Predicated region
    $region22: #{tpu_custom_call.1} parent=1 // pred_check
      _
    $region23: #{tpu_custom_call.1} parent=1 // pred_check_branch
      %390 = sbr.rel (0) target = $region25
    $region24: #{tpu_custom_call.1} parent=1 // pred_region
      %392 = dma.done [#allocation4], 64
    $region25: #{tpu_custom_call.1} parent=1 // pred_fallthru
      _
    %393 = vsyncpa [#allocation3], 1
    %394 = vsyncpa [#allocation6], 1
    %395 = vsyncpa [#allocation4], 1

</llo_original>
